<compile_context>
chip_gen: v5e
topology: v5e:2x2
jax: 0.10.0
libtpu: 0.0.40
codegen_flags: <defaults>
</compile_context>

<pallas_src>
import jax
import jax.numpy as jnp
from jax.experimental import pallas as pl
from jax.experimental.pallas import tpu as pltpu


def _softmax0_b2_kernel(x_ref, o_ref):
    # x_ref, o_ref: (2, N) float32 in VMEM.
    x0 = x_ref[0:1, :]                       # (1, N)
    x1 = x_ref[1:2, :]                       # (1, N)
    # softmax over axis 0 with exactly two rows:
    #   sm0 = exp(x0) / (exp(x0) + exp(x1)) = sigmoid(x0 - x1)
    #   sm1 = 1 - sm0
    p0 = jax.nn.sigmoid(x0 - x1)             # EUP transcendental, inherently stable
    o_ref[0:1, :] = p0 + 1.0                 # softmax + 1.0 (relu is a no-op: >= 1)
    o_ref[1:2, :] = 2.0 - p0                 # (1 - p0) + 1.0


def _softmax0_generic_kernel(x_ref, o_ref):
    # Fallback for B != 2: numerically stable softmax over axis 0.
    x = x_ref[...]
    m = jnp.max(x, axis=0, keepdims=True)
    e = jnp.exp(x - m)
    s = jnp.sum(e, axis=0, keepdims=True)
    o_ref[...] = e * pl.reciprocal(s, approx=True) + 1.0


def my_module_forward(x):
    B, S, D = x.shape
    # Lane-dense view: (B, S, D) -> (B, S*D); contiguous reshape, no data movement.
    x2 = x.reshape(B, S * D)
    kernel = _softmax0_b2_kernel if B == 2 else _softmax0_generic_kernel
    out2 = pl.pallas_call(
        kernel,
        out_shape=jax.ShapeDtypeStruct((B, S * D), x.dtype),
        in_specs=[pl.BlockSpec(memory_space=pltpu.MemorySpace.VMEM)],
        out_specs=pl.BlockSpec(memory_space=pltpu.MemorySpace.VMEM),
    )(x2)
    return out2.reshape(B, S, D)


if __name__ == "__main__":
    key = jax.random.PRNGKey(0)
    x = jax.random.normal(key, (2, 16, 4), dtype=jnp.float32)

    out = my_module_forward(x)
    out = jax.block_until_ready(out)

    # Reference in plain JAX (softmax over axis 0, +1, relu).
    ref = jnp.maximum(jax.nn.softmax(x, axis=0) + 1.0, 0.0)

    assert out.shape == (2, 16, 4)
    assert jnp.allclose(out, ref, atol=1e-5, rtol=1e-5)

    print("KERNEL_OK")
</pallas_src>

<mosaic_0001>
module attributes {stable_mosaic.version = 11 : i64} {
  func.func @_softmax0_b2_kernel(%arg0: memref<2x64xf32, #tpu.memory_space<vmem>>, %arg1: memref<2x64xf32, #tpu.memory_space<vmem>>) attributes {dimension_semantics = [], scalar_prefetch = 0 : i64, scratch_operands = 0 : i64, tpu.core_type = #tpu.core_type<tc>} {
    %c0 = arith.constant 0 : index
    %c0_0 = arith.constant 0 : index
    %0 = vector.load %arg0[%c0, %c0_0] : memref<2x64xf32, #tpu.memory_space<vmem>>, vector<1x64xf32>
    %c1 = arith.constant 1 : index
    %c0_1 = arith.constant 0 : index
    %1 = vector.load %arg0[%c1, %c0_1] : memref<2x64xf32, #tpu.memory_space<vmem>>, vector<1x64xf32>
    %2 = arith.subf %0, %1 : vector<1x64xf32>
    %3 = arith.negf %2 : vector<1x64xf32>
    %4 = math.exp %3 : vector<1x64xf32>
    %cst = arith.constant 1.000000e+00 : f32
    %5 = vector.broadcast %cst : f32 to vector<1x64xf32>
    %6 = arith.addf %5, %4 : vector<1x64xf32>
    %7 = arith.divf %5, %6 : vector<1x64xf32>
    %cst_2 = arith.constant 1.000000e+00 : f32
    %8 = vector.broadcast %cst_2 : f32 to vector<1x64xf32>
    %9 = arith.addf %7, %8 : vector<1x64xf32>
    %c0_3 = arith.constant 0 : index
    %c0_4 = arith.constant 0 : index
    %10 = vector.load %arg1[%c0_3, %c0_4] : memref<2x64xf32, #tpu.memory_space<vmem>>, vector<1x64xf32>
    tpu.vector_store %arg1[%c0_3, %c0_4], %9 {strides = array<i32>} : memref<2x64xf32, #tpu.memory_space<vmem>>, vector<1x64xf32>,
    %cst_5 = arith.constant 2.000000e+00 : f32
    %11 = vector.broadcast %cst_5 : f32 to vector<1x64xf32>
    %12 = arith.subf %11, %7 : vector<1x64xf32>
    %c1_6 = arith.constant 1 : index
    %c0_7 = arith.constant 0 : index
    %13 = vector.load %arg1[%c1_6, %c0_7] : memref<2x64xf32, #tpu.memory_space<vmem>>, vector<1x64xf32>
    tpu.vector_store %arg1[%c1_6, %c0_7], %12 {strides = array<i32>} : memref<2x64xf32, #tpu.memory_space<vmem>>, vector<1x64xf32>,
    return
  }
}

</mosaic_0001>

<llo_original>
// kernel: tpu_custom_call.1
$region0: #{tpu_custom_call.1}
  #allocation0 [shape = 'u32[]', space=smem, size = 0x4, offset = 0x4, fixed_abs, tag = 'smem constant byte address 0x4 - core index']
  #allocation1 [shape = 'u32[72,128]{1,0:T(1,128)}', space=vmem, size = 0x9000, scoped, tag = 'internal scratch']
  %s0 = inlined_call_operand.hbm [shape: f32[2,64], index: 0, kind: input, shape index: {}]
  %s1 = inlined_call_operand.hbm [shape: f32[2,64], index: 1, kind: output, shape index: {}]
  %s2 = sld [smem:[#allocation0]]
  $region18: #{tpu_custom_call.1} parent=0
    _
  %s4 = ssub.s32 1, %s2
  %s5 = scalar_select 0, %s4, %s2
  $region1: #{tpu_custom_call.1} parent=0
    #allocation2 [shape = 'u8[1024]{0}', space=vmem, size = 0x400, scoped, tag = 'input window, operand 0, single buffered']
    #allocation3 [shape = 's32[1]{0}', space=sflag, size = 0x4, scoped, tag = 'scoped memory for tpu_custom_call.1']
    #allocation4 [shape = 's32[1]{0}', space=sflag, size = 0x4, scoped, tag = 'scoped memory for tpu_custom_call.1']
    #allocation5 [shape = 'u8[1024]{0}', space=vmem, size = 0x400, scoped, tag = 'output window, operand 0, single buffered']
    %6 = vsyncpa [#allocation3], 0
    %7 = vsyncpa [#allocation4], 0
    // Predicated region
    $region2: #{tpu_custom_call.1} parent=1 // pred_check
      _
    $region3: #{tpu_custom_call.1} parent=1 // pred_check_branch
      %9 = sbr.rel (0) target = $region5
    $region4: #{tpu_custom_call.1} parent=1 // pred_region
      %11 = vsyncadd [#allocation3], 0
      %s13 = sshll.u32 %s0, 4
      %s14 = int_to_ptr.hbm [resolvable:$true] %s13
      %s15 = sshll.u32 [#allocation2], 4
      %s16 = int_to_ptr.vmem [resolvable:$true] %s15
      %18 = dma.hbm_to_vmem [thread:$0]  %s14, 32, %s16, [#allocation3]
    $region5: #{tpu_custom_call.1} parent=1 // pred_fallthru
      _
    // Predicated region
    $region6: #{tpu_custom_call.1} parent=1 // pred_check
      _
    $region7: #{tpu_custom_call.1} parent=1 // pred_check_branch
      %20 = sbr.rel (0) target = $region9
    $region8: #{tpu_custom_call.1} parent=1 // pred_region
      %22 = dma.done [#allocation3], 32
    $region9: #{tpu_custom_call.1} parent=1 // pred_fallthru
      _
    %v23 = vld [vmem:[#allocation2] sm:$0x1]
    %v24 = vld [vmem:[#allocation2 + $0x1] sm:$0x1]
    %v25 = vsub.f32 %v23, %v24
    %v26 = vxor.u32 %v25, 2147483648
    %v27 = vmul.f32 %v26, 1.442695
    %v28 = vpow.pop %v27
    %v29 = vadd.f32 %v28, 1.0
    %v30 = vrcp.pop %v29
    %v31 = vmul.f32 %v29, %v30
    %v32 = vsub.f32 1.0, %v31
    %v33 = vmul.f32 %v30, %v32
    %v34 = vadd.f32 %v30, %v33
    %vm35 = vweird.f32 %v29
    %vm36 = vweird.f32 %v30
    %vm37 = vmor %vm35, %vm36
    %v38 = vsel %vm37, %v30, %v34
    %v39 = vand.u32 2147483647, %v29
    %vm40 = vcmp.eq.f32.partialorder %v39, 8.507059e+37
    %v41 = vand.u32 %v29, 2147483648
    %v42 = vor.u32 1.1754944e-38, %v41
    %v43 = vsel %vm40, %v42, %v38
    %v44 = vmul.f32 1.0, %v43
    %v45 = vadd.f32 %v44, 1.0
    %vm46 = vcmask 516096
    %47 = vst.msk [vmem:[#allocation5] sm:$0x1] %vm46, %v45
    %v48 = vsub.f32 2.0, %v44
    %49 = vst.msk [vmem:[#allocation5 + $0x1] sm:$0x1] %vm46, %v48
    // Predicated region
    $region10: #{tpu_custom_call.1} parent=1 // pred_check
      _
    $region11: #{tpu_custom_call.1} parent=1 // pred_check_branch
      %51 = sbr.rel (0) target = $region13
    $region12: #{tpu_custom_call.1} parent=1 // pred_region
      %53 = vsyncadd [#allocation4], 0
      %s55 = sshll.u32 [#allocation5], 4
      %s56 = int_to_ptr.vmem [resolvable:$true] %s55
      %s57 = sshll.u32 %s1, 4
      %s58 = int_to_ptr.hbm [resolvable:$true] %s57
      %60 = dma.vmem_to_hbm [thread:$0]  %s56, 32, %s58, [#allocation4]
    $region13: #{tpu_custom_call.1} parent=1 // pred_fallthru
      _
    // Predicated region
    $region14: #{tpu_custom_call.1} parent=1 // pred_check
      _
    $region15: #{tpu_custom_call.1} parent=1 // pred_check_branch
      %62 = sbr.rel (0) target = $region17
    $region16: #{tpu_custom_call.1} parent=1 // pred_region
      %64 = dma.done [#allocation4], 32
    $region17: #{tpu_custom_call.1} parent=1 // pred_fallthru
      _
    %65 = vsyncpa [#allocation3], 1
    %66 = vsyncpa [#allocation4], 1

</llo_original>
